<compile_context>
chip_gen: v6e
topology: v6e:2x2x1
jax: 0.10.0
libtpu: 0.0.40
codegen_flags: <defaults>
</compile_context>

<pallas_src>
import jax
import jax.numpy as jnp
from jax.experimental import pallas as pl
from jax.experimental.pallas import tpu as pltpu


def _round_up(v, m):
    return ((v + m - 1) // m) * m


def _make_mlp_kernel(relu_flags):
    """Fused MLP body. Ref order: (x, w_0, b_0, ..., w_{L-1}, b_{L-1}, out)."""
    num_layers = len(relu_flags)

    def kernel(*refs):
        x_ref = refs[0]
        o_ref = refs[-1]
        wb = refs[1:-1]

        h = x_ref[...]
        for l in range(num_layers):
            w_ref = wb[2 * l]       # [in_l, out_l]
            b_ref = wb[2 * l + 1]   # [1, out_l] (f32)
            # Cast activations to the weight dtype so bf16 weights get a
            # native bf16 MXU matmul; accumulation stays f32.
            h = jnp.dot(h.astype(w_ref.dtype), w_ref[...],
                        preferred_element_type=jnp.float32)
            h = h + b_ref[...].astype(jnp.float32)
            if relu_flags[l]:
                h = jnp.maximum(h, 0.0)
        o_ref[...] = h.astype(o_ref.dtype)

    return kernel


def _fused_call(x_flat, w_mats, b_rows, relu_flags, out_dtype, *, vmem_budget):
    """One pallas_call running all given layers with weights VMEM-resident."""
    N, input_dim = x_flat.shape
    out_dim = w_mats[-1].shape[1]

    # Lane-dense output: pad the final layer to a 128-multiple width when the
    # extra HBM bytes are cheap (output >= 64 wide); tiny outputs keep masked
    # stores instead.
    out_pad = out_dim
    if out_dim % 128 != 0 and out_dim >= 64:
        out_pad = _round_up(out_dim, 128)
        w_mats = list(w_mats[:-1]) + [
            jnp.pad(w_mats[-1], ((0, 0), (0, out_pad - out_dim)))]
        b_rows = list(b_rows[:-1]) + [
            jnp.pad(b_rows[-1], ((0, 0), (0, out_pad - out_dim)))]

    x_bytes = x_flat.dtype.itemsize
    out_bytes = jnp.dtype(out_dtype).itemsize
    weight_bytes = sum(int(w.size) * w.dtype.itemsize for w in w_mats)
    weight_bytes += sum(int(b.size) * b.dtype.itemsize for b in b_rows)
    max_dim = max([input_dim] + [w.shape[1] for w in w_mats])

    # ---- adaptive TM selection -------------------------------------------
    # Per-row VMEM: double-buffered x tile + double-buffered out tile + two
    # live f32 activation temporaries of width <= max_dim.
    per_row_vmem = (2 * input_dim * x_bytes + 2 * out_pad * out_bytes
                    + 2 * max_dim * 4)
    avail = max(vmem_budget - weight_bytes, 8 * per_row_vmem)
    tm = max(8, avail // per_row_vmem)
    # Target ~2 MiB of HBM traffic per grid step (amortize ~0.35us overhead).
    per_row_hbm = input_dim * x_bytes + out_pad * out_bytes
    tm = min(tm, max(8, pl.cdiv(2 << 20, per_row_hbm)))
    tm = min(tm, 8192)
    # v7x megacore: keep >= 2 grid steps so the "parallel" axis can shard
    # across both TensorCores (no-op on single-TC v5e/v6e).
    if N > 16:
        tm = min(tm, _round_up(pl.cdiv(N, 2), 8))
    if tm >= N:
        tm = N                      # single full block (always layout-legal)
    else:
        tm = max(8, (tm // 8) * 8)  # sublane-aligned partial block

    grid = (pl.cdiv(N, tm),)

    in_specs = [pl.BlockSpec((tm, input_dim), lambda i: (i, 0))]
    operands = [x_flat]
    for w, b in zip(w_mats, b_rows):
        # Constant index_map => single-buffer the resident weights/biases.
        in_specs.append(pl.BlockSpec(w.shape, lambda i: (0, 0),
                                     pipeline_mode=pl.Buffered(1)))
        in_specs.append(pl.BlockSpec(b.shape, lambda i: (0, 0),
                                     pipeline_mode=pl.Buffered(1)))
        operands += [w, b]

    out_spec = pl.BlockSpec((tm, out_pad), lambda i: (i, 0))

    flops = 2 * N * sum(w.shape[0] * w.shape[1] for w in w_mats)
    bytes_accessed = (N * input_dim * x_bytes + weight_bytes
                      + N * out_pad * out_bytes)
    vmem_estimate = weight_bytes + tm * per_row_vmem + (1 << 20)
    vmem_limit = int(min(max(vmem_estimate * 5 // 4, 16 << 20), 60 << 20))

    out = pl.pallas_call(
        _make_mlp_kernel(tuple(relu_flags)),
        out_shape=jax.ShapeDtypeStruct((N, out_pad), out_dtype),
        grid_spec=pltpu.PrefetchScalarGridSpec(
            num_scalar_prefetch=0,
            grid=grid,
            in_specs=in_specs,
            out_specs=out_spec,
        ),
        compiler_params=pltpu.CompilerParams(
            dimension_semantics=("parallel",),
            vmem_limit_bytes=vmem_limit,
        ),
        cost_estimate=pl.CostEstimate(
            flops=flops, transcendentals=0, bytes_accessed=bytes_accessed),
    )(*operands)

    if out_pad != out_dim:
        out = out[:, :out_dim]
    return out


def mlp_forward(x, weights, biases, *, param_dtype=None, vmem_budget=40 << 20):
    """Fused MLP forward:  x.view(N, -1) -> [Linear+ReLU]*(L-1) -> Linear.

    x       : [N, ...]               (flattened to [N, input_dim])
    weights : list of [out_l, in_l]  (PyTorch nn.Linear layout)
    biases  : list of [out_l]
    param_dtype : optional dtype (e.g. jnp.bfloat16) to cast x/weights to;
                  accumulation is always f32, biases stay f32.
    """
    N = x.shape[0]
    x_flat = x.reshape(N, -1)
    num_layers = len(weights)
    out_dtype = x.dtype

    if param_dtype is not None:
        x_flat = x_flat.astype(param_dtype)
        w_mats = [w.T.astype(param_dtype) for w in weights]
    else:
        w_mats = [w.T for w in weights]
    b_rows = [b.reshape(1, -1).astype(jnp.float32) for b in biases]

    relu_flags = [True] * (num_layers - 1) + [False]

    weight_bytes = sum(int(w.size) * w.dtype.itemsize for w in w_mats)
    weight_bytes += sum(int(b.size) * b.dtype.itemsize for b in b_rows)
    max_dim = max([x_flat.shape[1]] + [w.shape[1] for w in w_mats])
    min_act_bytes = 8 * max_dim * 4 * 6   # minimal (TM=8) tile + temp footprint

    # Fast path: every weight fits VMEM-resident -> one fused call.
    if weight_bytes + min_act_bytes <= vmem_budget:
        return _fused_call(x_flat, w_mats, b_rows, relu_flags, out_dtype,
                           vmem_budget=vmem_budget)

    # Fallback: per-layer pallas_calls (one resident weight at a time).
    h = x_flat
    for l in range(num_layers):
        w, b = w_mats[l], b_rows[l]
        layer_bytes = (int(w.size) * w.dtype.itemsize
                       + int(b.size) * b.dtype.itemsize)
        if layer_bytes + min_act_bytes <= vmem_budget:
            h = _fused_call(h, [w], [b], [relu_flags[l]], out_dtype,
                            vmem_budget=vmem_budget)
        else:
            # Single layer too large even alone: plain XLA for this layer.
            h = jnp.dot(h.astype(w.dtype), w,
                        preferred_element_type=jnp.float32) + b
            if relu_flags[l]:
                h = jnp.maximum(h, 0.0)
            h = h.astype(out_dtype)
    return h


def _reference(x, weights, biases):
    N = x.shape[0]
    h = x.reshape(N, -1)
    L = len(weights)
    for l in range(L):
        h = h @ weights[l].T + biases[l]
        if l < L - 1:
            h = jnp.maximum(h, 0.0)
    return h


if __name__ == "__main__":
    # MLP(input_dim=8, output_dim=16, dim=32, n_blk=3, norm='none', activ='relu')
    C, H, W = 8, 1, 1           # x.view(N, -1) -> input_dim = 8 (style-code-like)
    input_dim = C * H * W
    dim = 32
    output_dim = 16
    n_blk = 3

    key = jax.random.PRNGKey(0)
    layer_dims = [(input_dim, dim)] + [(dim, dim)] * (n_blk - 2) + [(dim, output_dim)]
    weights, biases = [], []
    for fan_in, fan_out in layer_dims:
        kw, kb, key = jax.random.split(key, 3)
        bound = 1.0 / (fan_in ** 0.5)   # nn.Linear default init bound
        weights.append(jax.random.uniform(kw, (fan_out, fan_in),
                                          minval=-bound, maxval=bound,
                                          dtype=jnp.float32))
        biases.append(jax.random.uniform(kb, (fan_out,),
                                         minval=-bound, maxval=bound,
                                         dtype=jnp.float32))

    # --- test 1: tiny batch, f32 (single grid step) -------------------------
    kx, key = jax.random.split(key)
    x_small = jax.random.normal(kx, (2, C, H, W), dtype=jnp.float32)
    out = mlp_forward(x_small, weights, biases)
    jax.block_until_ready(out)
    ref = _reference(x_small, weights, biases)
    assert out.shape == (2, output_dim)
    assert jnp.allclose(out, ref, atol=1e-5, rtol=1e-5)

    # --- test 2: larger batch, multi-step grid + remainder tile -------------
    kx, key = jax.random.split(key)
    x_big = jax.random.normal(kx, (520, C, H, W), dtype=jnp.float32)
    out_big = mlp_forward(x_big, weights, biases)
    jax.block_until_ready(out_big)
    ref_big = _reference(x_big, weights, biases)
    assert out_big.shape == (520, output_dim)
    assert jnp.allclose(out_big, ref_big, atol=1e-5, rtol=1e-5)

    # --- test 3: bf16 weight/activation path (f32 accumulation) -------------
    out_bf16 = mlp_forward(x_small, weights, biases, param_dtype=jnp.bfloat16)
    jax.block_until_ready(out_bf16)
    assert jnp.allclose(out_bf16, ref, atol=5e-2, rtol=5e-2)

    print("KERNEL_OK")
</pallas_src>

<mosaic_0001>
module attributes {stable_mosaic.version = 11 : i64} {
  func.func @kernel(%arg0: i32, %arg1: memref<2x8xf32, #tpu.memory_space<vmem>>, %arg2: memref<8x32xf32, #tpu.memory_space<vmem>>, %arg3: memref<1x32xf32, #tpu.memory_space<vmem>>, %arg4: memref<32x32xf32, #tpu.memory_space<vmem>>, %arg5: memref<1x32xf32, #tpu.memory_space<vmem>>, %arg6: memref<32x16xf32, #tpu.memory_space<vmem>>, %arg7: memref<1x16xf32, #tpu.memory_space<vmem>>, %arg8: memref<2x16xf32, #tpu.memory_space<vmem>>) attributes {dimension_semantics = [#tpu.dimension_semantics<parallel>], iteration_bounds = array<i64: 1>, scalar_prefetch = 0 : i64, scratch_operands = 0 : i64, tpu.core_type = #tpu.core_type<tc>, window_params = [{transform_indices = @transform_0, window_bounds = array<i64: 2, 8>}, {pipeline_mode = #tpu.pipeline_mode<synchronous>, transform_indices = @transform_1, window_bounds = array<i64: 8, 32>}, {pipeline_mode = #tpu.pipeline_mode<synchronous>, transform_indices = @transform_2, window_bounds = array<i64: 1, 32>}, {pipeline_mode = #tpu.pipeline_mode<synchronous>, transform_indices = @transform_3, window_bounds = array<i64: 32, 32>}, {pipeline_mode = #tpu.pipeline_mode<synchronous>, transform_indices = @transform_4, window_bounds = array<i64: 1, 32>}, {pipeline_mode = #tpu.pipeline_mode<synchronous>, transform_indices = @transform_5, window_bounds = array<i64: 32, 16>}, {pipeline_mode = #tpu.pipeline_mode<synchronous>, transform_indices = @transform_6, window_bounds = array<i64: 1, 16>}, {transform_indices = @transform_7, window_bounds = array<i64: 2, 16>}]} {
    %c0 = arith.constant 0 : index
    %c0_0 = arith.constant 0 : index
    %0 = vector.load %arg1[%c0, %c0_0] : memref<2x8xf32, #tpu.memory_space<vmem>>, vector<2x8xf32>
    %c0_1 = arith.constant 0 : index
    %c0_2 = arith.constant 0 : index
    %1 = vector.load %arg2[%c0_1, %c0_2] : memref<8x32xf32, #tpu.memory_space<vmem>>, vector<8x32xf32>
    %cst = arith.constant dense<0.000000e+00> : vector<2x32xf32>
    %2 = tpu.matmul %0, %1, %cst {dimension_numbers = #tpu.dot_dimension_numbers<[1], [0], [0], [1], [0, 0, 1, 1], [], []>} : vector<2x8xf32>, vector<8x32xf32>, vector<2x32xf32> -> vector<2x32xf32>
    %c0_3 = arith.constant 0 : index
    %c0_4 = arith.constant 0 : index
    %3 = vector.load %arg3[%c0_3, %c0_4] : memref<1x32xf32, #tpu.memory_space<vmem>>, vector<1x32xf32>
    %4 = vector.broadcast %3 : vector<1x32xf32> to vector<2x32xf32>
    %5 = arith.addf %2, %4 : vector<2x32xf32>
    %cst_5 = arith.constant 0.000000e+00 : f32
    %6 = vector.broadcast %cst_5 : f32 to vector<2x32xf32>
    %7 = arith.maximumf %5, %6 : vector<2x32xf32>
    %c0_6 = arith.constant 0 : index
    %c0_7 = arith.constant 0 : index
    %8 = vector.load %arg4[%c0_6, %c0_7] : memref<32x32xf32, #tpu.memory_space<vmem>>, vector<32x32xf32>
    %cst_8 = arith.constant dense<0.000000e+00> : vector<2x32xf32>
    %9 = tpu.matmul %7, %8, %cst_8 {dimension_numbers = #tpu.dot_dimension_numbers<[1], [0], [0], [1], [0, 0, 1, 1], [], []>} : vector<2x32xf32>, vector<32x32xf32>, vector<2x32xf32> -> vector<2x32xf32>
    %c0_9 = arith.constant 0 : index
    %c0_10 = arith.constant 0 : index
    %10 = vector.load %arg5[%c0_9, %c0_10] : memref<1x32xf32, #tpu.memory_space<vmem>>, vector<1x32xf32>
    %11 = vector.broadcast %10 : vector<1x32xf32> to vector<2x32xf32>
    %12 = arith.addf %9, %11 : vector<2x32xf32>
    %cst_11 = arith.constant 0.000000e+00 : f32
    %13 = vector.broadcast %cst_11 : f32 to vector<2x32xf32>
    %14 = arith.maximumf %12, %13 : vector<2x32xf32>
    %c0_12 = arith.constant 0 : index
    %c0_13 = arith.constant 0 : index
    %15 = vector.load %arg6[%c0_12, %c0_13] : memref<32x16xf32, #tpu.memory_space<vmem>>, vector<32x16xf32>
    %cst_14 = arith.constant dense<0.000000e+00> : vector<2x16xf32>
    %16 = tpu.matmul %14, %15, %cst_14 {dimension_numbers = #tpu.dot_dimension_numbers<[1], [0], [0], [1], [0, 0, 1, 1], [], []>} : vector<2x32xf32>, vector<32x16xf32>, vector<2x16xf32> -> vector<2x16xf32>
    %c0_15 = arith.constant 0 : index
    %c0_16 = arith.constant 0 : index
    %17 = vector.load %arg7[%c0_15, %c0_16] : memref<1x16xf32, #tpu.memory_space<vmem>>, vector<1x16xf32>
    %18 = vector.broadcast %17 : vector<1x16xf32> to vector<2x16xf32>
    %19 = arith.addf %16, %18 : vector<2x16xf32>
    %c0_17 = arith.constant 0 : index
    %c0_18 = arith.constant 0 : index
    %20 = vector.load %arg8[%c0_17, %c0_18] : memref<2x16xf32, #tpu.memory_space<vmem>>, vector<2x16xf32>
    tpu.vector_store %arg8[%c0_17, %c0_18], %19 {strides = array<i32>} : memref<2x16xf32, #tpu.memory_space<vmem>>, vector<2x16xf32>,
    return
  }
  func.func @transform_0(%arg0: i32) -> (i32, i32) {
    %c0_i32 = arith.constant 0 : i32
    %c0_i32_0 = arith.constant 0 : i32
    return %arg0, %c0_i32 : i32, i32
  }
  func.func @transform_1(%arg0: i32) -> (i32, i32) {
    %c0_i32 = arith.constant 0 : i32
    %c0_i32_0 = arith.constant 0 : i32
    %c0_i32_1 = arith.constant 0 : i32
    return %c0_i32, %c0_i32_0 : i32, i32
  }
  func.func @transform_2(%arg0: i32) -> (i32, i32) {
    %c0_i32 = arith.constant 0 : i32
    %c0_i32_0 = arith.constant 0 : i32
    %c0_i32_1 = arith.constant 0 : i32
    return %c0_i32, %c0_i32_0 : i32, i32
  }
  func.func @transform_3(%arg0: i32) -> (i32, i32) {
    %c0_i32 = arith.constant 0 : i32
    %c0_i32_0 = arith.constant 0 : i32
    %c0_i32_1 = arith.constant 0 : i32
    return %c0_i32, %c0_i32_0 : i32, i32
  }
  func.func @transform_4(%arg0: i32) -> (i32, i32) {
    %c0_i32 = arith.constant 0 : i32
    %c0_i32_0 = arith.constant 0 : i32
    %c0_i32_1 = arith.constant 0 : i32
    return %c0_i32, %c0_i32_0 : i32, i32
  }
  func.func @transform_5(%arg0: i32) -> (i32, i32) {
    %c0_i32 = arith.constant 0 : i32
    %c0_i32_0 = arith.constant 0 : i32
    %c0_i32_1 = arith.constant 0 : i32
    return %c0_i32, %c0_i32_0 : i32, i32
  }
  func.func @transform_6(%arg0: i32) -> (i32, i32) {
    %c0_i32 = arith.constant 0 : i32
    %c0_i32_0 = arith.constant 0 : i32
    %c0_i32_1 = arith.constant 0 : i32
    return %c0_i32, %c0_i32_0 : i32, i32
  }
  func.func @transform_7(%arg0: i32) -> (i32, i32) {
    %c0_i32 = arith.constant 0 : i32
    %c0_i32_0 = arith.constant 0 : i32
    return %arg0, %c0_i32 : i32, i32
  }
}

</mosaic_0001>

<llo_original>
// kernel: tpu_custom_call.1
$region0: #{tpu_custom_call.1}
  #allocation0 [shape = 'u32[]', space=smem, size = 0x4, offset = 0x4, fixed_abs, tag = 'smem constant byte address 0x4 - core index']
  #allocation1 [shape = 'u32[144,128]{1,0:T(1,128)}', space=vmem, size = 0x12000, scoped, tag = 'internal scratch']
  %s0 = inlined_call_operand.vmem [shape: f32[2,8], index: 0, kind: input, shape index: {}]
  %s1 = inlined_call_operand.vmem [shape: f32[8,32], index: 1, kind: input, shape index: {}]
  %s2 = inlined_call_operand.vmem [shape: f32[1,32], index: 2, kind: input, shape index: {}]
  %s3 = inlined_call_operand.vmem [shape: f32[32,32], index: 3, kind: input, shape index: {}]
  %s4 = inlined_call_operand.vmem [shape: f32[1,32], index: 4, kind: input, shape index: {}]
  %s5 = inlined_call_operand.vmem [shape: f32[32,16], index: 5, kind: input, shape index: {}]
  %s6 = inlined_call_operand.vmem [shape: f32[1,16], index: 6, kind: input, shape index: {}]
  %s7 = inlined_call_operand.hbm [shape: f32[2,16], index: 7, kind: output, shape index: {}]
  %s8 = sld [smem:[#allocation0]]
  $region38: #{tpu_custom_call.1} parent=0
    _
  %s10 = ssub.s32 1, %s8
  %s11 = scalar_select 0, %s10, %s8
  $region1: #{tpu_custom_call.1} parent=0
    #allocation2 [shape = 'u8[1024]{0}', space=vmem, size = 0x400, scoped, tag = 'output window, operand 0, single buffered']
    #allocation3 [shape = 's32[1]{0}', space=sflag, size = 0x4, scoped, tag = 'scoped memory for tpu_custom_call.1']
    %12 = vsyncpa [#allocation3], 0
    // Predicated region
    $region2: #{tpu_custom_call.1} parent=1 // pred_check
      _
    $region3: #{tpu_custom_call.1} parent=1 // pred_check_branch
      %14 = sbr.rel (0) target = $region5
    $region4: #{tpu_custom_call.1} parent=1 // pred_region
      _
    $region5: #{tpu_custom_call.1} parent=1 // pred_fallthru
      _
    // Predicated region
    $region6: #{tpu_custom_call.1} parent=1 // pred_check
      _
    $region7: #{tpu_custom_call.1} parent=1 // pred_check_branch
      %16 = sbr.rel (0) target = $region9
    $region8: #{tpu_custom_call.1} parent=1 // pred_region
      _
    $region9: #{tpu_custom_call.1} parent=1 // pred_fallthru
      _
    // Predicated region
    $region10: #{tpu_custom_call.1} parent=1 // pred_check
      _
    $region11: #{tpu_custom_call.1} parent=1 // pred_check_branch
      %18 = sbr.rel (0) target = $region13
    $region12: #{tpu_custom_call.1} parent=1 // pred_region
      _
    $region13: #{tpu_custom_call.1} parent=1 // pred_fallthru
      _
    // Predicated region
    $region14: #{tpu_custom_call.1} parent=1 // pred_check
      _
    $region15: #{tpu_custom_call.1} parent=1 // pred_check_branch
      %20 = sbr.rel (0) target = $region17
    $region16: #{tpu_custom_call.1} parent=1 // pred_region
      _
    $region17: #{tpu_custom_call.1} parent=1 // pred_fallthru
      _
    // Predicated region
    $region18: #{tpu_custom_call.1} parent=1 // pred_check
      _
    $region19: #{tpu_custom_call.1} parent=1 // pred_check_branch
      %22 = sbr.rel (0) target = $region21
    $region20: #{tpu_custom_call.1} parent=1 // pred_region
      _
    $region21: #{tpu_custom_call.1} parent=1 // pred_fallthru
      _
    // Predicated region
    $region22: #{tpu_custom_call.1} parent=1 // pred_check
      _
    $region23: #{tpu_custom_call.1} parent=1 // pred_check_branch
      %24 = sbr.rel (0) target = $region25
    $region24: #{tpu_custom_call.1} parent=1 // pred_region
      _
    $region25: #{tpu_custom_call.1} parent=1 // pred_fallthru
      _
    // Predicated region
    $region26: #{tpu_custom_call.1} parent=1 // pred_check
      _
    $region27: #{tpu_custom_call.1} parent=1 // pred_check_branch
      %26 = sbr.rel (0) target = $region29
    $region28: #{tpu_custom_call.1} parent=1 // pred_region
      _
    $region29: #{tpu_custom_call.1} parent=1 // pred_fallthru
      _
    %v27 = vld [vmem:[%s0] sm:$0x3]
    %v28 = vld [vmem:[%s1] sm:$0xff]
    %v29 = vld [vmem:[%s2] sm:$0x1]
    %v31 = vlaneseq
    %v32 = vshrl.u32 %v31, 7
    %v33 = vsub.s32 0, %v32
    %v34 = vrot.slane %v29, %v33
    %vm36 = vcmask 64512
    %v38 = vsel %vm36, %v27, 0
    %40 = vmatprep.subr.mxu0 0.0
    %41 = vmatpush1.msra.mxu0 0.0
    %42 = vmatprep.subr.mxu0 0.0
    %43 = vmatpush1.msra.mxu0 0.0
    %44 = vmatprep.subr.mxu0 0.0
    %45 = vmatpush1.msra.mxu0 0.0
    %46 = vmatprep.subr.mxu0 0.0
    %47 = vmatpush1.msra.mxu0 0.0
    %48 = vmatprep.subr.mxu0 0.0
    %49 = vmatpush1.msra.mxu0 0.0
    %50 = vmatprep.subr.mxu0 0.0
    %51 = vmatpush1.msra.mxu0 0.0
    %52 = vmatprep.subr.mxu0 0.0
    %53 = vmatpush1.msra.mxu0 0.0
    %54 = vmatprep.subr.mxu0 0.0
    %55 = vmatpush1.msra.mxu0 0.0
    %56 = vmatprep.subr.mxu0 0.0
    %57 = vmatpush1.msra.mxu0 0.0
    %58 = vmatprep.subr.mxu0 0.0
    %59 = vmatpush1.msra.mxu0 0.0
    %60 = vmatprep.subr.mxu0 0.0
    %61 = vmatpush1.msra.mxu0 0.0
    %62 = vmatprep.subr.mxu0 0.0
    %63 = vmatpush1.msra.mxu0 0.0
    %64 = vmatprep.subr.mxu0 0.0
    %65 = vmatpush1.msra.mxu0 0.0
    %66 = vmatprep.subr.mxu0 0.0
    %67 = vmatpush1.msra.mxu0 0.0
    %68 = vmatprep.subr.mxu0 0.0
    %69 = vmatpush1.msra.mxu0 0.0
    %70 = vmatprep.subr.mxu0 0.0
    %71 = vmatpush1.msra.mxu0 %v28
    %72 = vmatprep.subr.mxu0 0.0
    %73 = vmatpush2.msra.mxu0 0.0
    %74 = vmatprep.subr.mxu0 0.0
    %75 = vmatpush2.msra.mxu0 0.0
    %76 = vmatprep.subr.mxu0 0.0
    %77 = vmatpush2.msra.mxu0 0.0
    %78 = vmatprep.subr.mxu0 0.0
    %79 = vmatpush2.msra.mxu0 0.0
    %80 = vmatprep.subr.mxu0 0.0
    %81 = vmatpush2.msra.mxu0 0.0
    %82 = vmatprep.subr.mxu0 0.0
    %83 = vmatpush2.msra.mxu0 0.0
    %84 = vmatprep.subr.mxu0 0.0
    %85 = vmatpush2.msra.mxu0 0.0
    %86 = vmatprep.subr.mxu0 0.0
    %87 = vmatpush2.msra.mxu0 0.0
    %88 = vmatprep.subr.mxu0 0.0
    %89 = vmatpush2.msra.mxu0 0.0
    %90 = vmatprep.subr.mxu0 0.0
    %91 = vmatpush2.msra.mxu0 0.0
    %92 = vmatprep.subr.mxu0 0.0
    %93 = vmatpush2.msra.mxu0 0.0
    %94 = vmatprep.subr.mxu0 0.0
    %95 = vmatpush2.msra.mxu0 0.0
    %96 = vmatprep.subr.mxu0 0.0
    %97 = vmatpush2.msra.mxu0 0.0
    %98 = vmatprep.subr.mxu0 0.0
    %99 = vmatpush2.msra.mxu0 0.0
    %100 = vmatprep.subr.mxu0 0.0
    %101 = vmatpush2.msra.mxu0 0.0
    %102 = vmatprep.subr.mxu0 0.0
    %103 = vmatpush2.msra.mxu0 0.0
    %104 = vmatprep.mubr.f32.mxu0 0.0
    %105 = vmatmul.mubr.f32.gmra.mxu0 %v38
    %v106 = vpop.f32.mrf.mxu0
    %v107 = vadd.f32 %v34, %v106
    %v108 = vpop.f32.mrf.mxu0
    %109 = vdwg.mxu0
    %v110 = vmax.f32 %v107, 0.0
    %v111 = vld [vmem:[%s3] sm:$0xff]
    %v112 = vld [vmem:[%s3 + $0x8] sm:$0xff]
    %v113 = vld [vmem:[%s3 + $0x10] sm:$0xff]
    %v114 = vld [vmem:[%s3 + $0x18] sm:$0xff]
    %v115 = vld [vmem:[%s4] sm:$0x1]
    %v117 = vlaneseq
    %v118 = vshrl.u32 %v117, 7
    %v119 = vsub.s32 0, %v118
    %v120 = vrot.slane %v115, %v119
    %vm122 = vcmask 261120
    %v124 = vsel %vm122, %v110, 0
    %126 = vmatprep.subr.mxu0 0.0
    %127 = vmatpush1.msra.mxu0 0.0
    %128 = vmatprep.subr.mxu0 0.0
    %129 = vmatpush1.msra.mxu0 0.0
    %130 = vmatprep.subr.mxu0 0.0
    %131 = vmatpush1.msra.mxu0 0.0
    %132 = vmatprep.subr.mxu0 0.0
    %133 = vmatpush1.msra.mxu0 0.0
    %134 = vmatprep.subr.mxu0 0.0
    %135 = vmatpush1.msra.mxu0 0.0
    %136 = vmatprep.subr.mxu0 0.0
    %137 = vmatpush1.msra.mxu0 0.0
    %138 = vmatprep.subr.mxu0 0.0
    %139 = vmatpush1.msra.mxu0 0.0
    %140 = vmatprep.subr.mxu0 0.0
    %141 = vmatpush1.msra.mxu0 0.0
    %142 = vmatprep.subr.mxu0 0.0
    %143 = vmatpush1.msra.mxu0 0.0
    %144 = vmatprep.subr.mxu0 0.0
    %145 = vmatpush1.msra.mxu0 0.0
    %146 = vmatprep.subr.mxu0 0.0
    %147 = vmatpush1.msra.mxu0 0.0
    %148 = vmatprep.subr.mxu0 0.0
    %149 = vmatpush1.msra.mxu0 0.0
    %150 = vmatprep.subr.mxu0 0.0
    %151 = vmatpush1.msra.mxu0 %v114
    %152 = vmatprep.subr.mxu0 0.0
    %153 = vmatpush1.msra.mxu0 %v113
    %154 = vmatprep.subr.mxu0 0.0
    %155 = vmatpush1.msra.mxu0 %v112
    %156 = vmatprep.subr.mxu0 0.0
    %157 = vmatpush1.msra.mxu0 %v111
    %158 = vmatprep.subr.mxu0 0.0
    %159 = vmatpush2.msra.mxu0 0.0
    %160 = vmatprep.subr.mxu0 0.0
    %161 = vmatpush2.msra.mxu0 0.0
    %162 = vmatprep.subr.mxu0 0.0
    %163 = vmatpush2.msra.mxu0 0.0
    %164 = vmatprep.subr.mxu0 0.0
    %165 = vmatpush2.msra.mxu0 0.0
    %166 = vmatprep.subr.mxu0 0.0
    %167 = vmatpush2.msra.mxu0 0.0
    %168 = vmatprep.subr.mxu0 0.0
    %169 = vmatpush2.msra.mxu0 0.0
    %170 = vmatprep.subr.mxu0 0.0
    %171 = vmatpush2.msra.mxu0 0.0
    %172 = vmatprep.subr.mxu0 0.0
    %173 = vmatpush2.msra.mxu0 0.0
    %174 = vmatprep.subr.mxu0 0.0
    %175 = vmatpush2.msra.mxu0 0.0
    %176 = vmatprep.subr.mxu0 0.0
    %177 = vmatpush2.msra.mxu0 0.0
    %178 = vmatprep.subr.mxu0 0.0
    %179 = vmatpush2.msra.mxu0 0.0
    %180 = vmatprep.subr.mxu0 0.0
    %181 = vmatpush2.msra.mxu0 0.0
    %182 = vmatprep.subr.mxu0 0.0
    %183 = vmatpush2.msra.mxu0 0.0
    %184 = vmatprep.subr.mxu0 0.0
    %185 = vmatpush2.msra.mxu0 0.0
    %186 = vmatprep.subr.mxu0 0.0
    %187 = vmatpush2.msra.mxu0 0.0
    %188 = vmatprep.subr.mxu0 0.0
    %189 = vmatpush2.msra.mxu0 0.0
    %190 = vmatprep.mubr.f32.mxu0 0.0
    %191 = vmatmul.mubr.f32.gmra.mxu0 %v124
    %v192 = vpop.f32.mrf.mxu0
    %v193 = vadd.f32 %v120, %v192
    %v194 = vpop.f32.mrf.mxu0
    %195 = vdwg.mxu0
    %v196 = vmax.f32 %v193, 0.0
    %v197 = vld [vmem:[%s5] sm:$0xff]
    %v198 = vld [vmem:[%s5 + $0x8] sm:$0xff]
    %v199 = vld [vmem:[%s5 + $0x10] sm:$0xff]
    %v200 = vld [vmem:[%s5 + $0x18] sm:$0xff]
    %v201 = vld [vmem:[%s6] sm:$0x1]
    %v203 = vlaneseq
    %v204 = vshrl.u32 %v203, 7
    %v205 = vsub.s32 0, %v204
    %v206 = vrot.slane %v201, %v205
    %v209 = vsel %vm122, %v196, 0
    %211 = vmatprep.subr.mxu0 0.0
    %212 = vmatpush1.msra.mxu0 0.0
    %213 = vmatprep.subr.mxu0 0.0
    %214 = vmatpush1.msra.mxu0 0.0
    %215 = vmatprep.subr.mxu0 0.0
    %216 = vmatpush1.msra.mxu0 0.0
    %217 = vmatprep.subr.mxu0 0.0
    %218 = vmatpush1.msra.mxu0 0.0
    %219 = vmatprep.subr.mxu0 0.0
    %220 = vmatpush1.msra.mxu0 0.0
    %221 = vmatprep.subr.mxu0 0.0
    %222 = vmatpush1.msra.mxu0 0.0
    %223 = vmatprep.subr.mxu0 0.0
    %224 = vmatpush1.msra.mxu0 0.0
    %225 = vmatprep.subr.mxu0 0.0
    %226 = vmatpush1.msra.mxu0 0.0
    %227 = vmatprep.subr.mxu0 0.0
    %228 = vmatpush1.msra.mxu0 0.0
    %229 = vmatprep.subr.mxu0 0.0
    %230 = vmatpush1.msra.mxu0 0.0
    %231 = vmatprep.subr.mxu0 0.0
    %232 = vmatpush1.msra.mxu0 0.0
    %233 = vmatprep.subr.mxu0 0.0
    %234 = vmatpush1.msra.mxu0 0.0
    %235 = vmatprep.subr.mxu0 0.0
    %236 = vmatpush1.msra.mxu0 %v200
    %237 = vmatprep.subr.mxu0 0.0
    %238 = vmatpush1.msra.mxu0 %v199
    %239 = vmatprep.subr.mxu0 0.0
    %240 = vmatpush1.msra.mxu0 %v198
    %241 = vmatprep.subr.mxu0 0.0
    %242 = vmatpush1.msra.mxu0 %v197
    %243 = vmatprep.subr.mxu0 0.0
    %244 = vmatpush2.msra.mxu0 0.0
    %245 = vmatprep.subr.mxu0 0.0
    %246 = vmatpush2.msra.mxu0 0.0
    %247 = vmatprep.subr.mxu0 0.0
    %248 = vmatpush2.msra.mxu0 0.0
    %249 = vmatprep.subr.mxu0 0.0
    %250 = vmatpush2.msra.mxu0 0.0
    %251 = vmatprep.subr.mxu0 0.0
    %252 = vmatpush2.msra.mxu0 0.0
    %253 = vmatprep.subr.mxu0 0.0
    %254 = vmatpush2.msra.mxu0 0.0
    %255 = vmatprep.subr.mxu0 0.0
    %256 = vmatpush2.msra.mxu0 0.0
    %257 = vmatprep.subr.mxu0 0.0
    %258 = vmatpush2.msra.mxu0 0.0
    %259 = vmatprep.subr.mxu0 0.0
    %260 = vmatpush2.msra.mxu0 0.0
    %261 = vmatprep.subr.mxu0 0.0
    %262 = vmatpush2.msra.mxu0 0.0
    %263 = vmatprep.subr.mxu0 0.0
    %264 = vmatpush2.msra.mxu0 0.0
    %265 = vmatprep.subr.mxu0 0.0
    %266 = vmatpush2.msra.mxu0 0.0
    %267 = vmatprep.subr.mxu0 0.0
    %268 = vmatpush2.msra.mxu0 0.0
    %269 = vmatprep.subr.mxu0 0.0
    %270 = vmatpush2.msra.mxu0 0.0
    %271 = vmatprep.subr.mxu0 0.0
    %272 = vmatpush2.msra.mxu0 0.0
    %273 = vmatprep.subr.mxu0 0.0
    %274 = vmatpush2.msra.mxu0 0.0
    %275 = vmatprep.mubr.f32.mxu0 0.0
    %276 = vmatmul.mubr.f32.gmra.mxu0 %v209
    %v277 = vpop.f32.mrf.mxu0
    %v278 = vadd.f32 %v206, %v277
    %v279 = vpop.f32.mrf.mxu0
    %280 = vdwg.mxu0
    %vm281 = vcmask 123904
    %282 = vst.msk [vmem:[#allocation2] sm:$0x3] %vm281, %v278
    // Predicated region
    $region30: #{tpu_custom_call.1} parent=1 // pred_check
      _
    $region31: #{tpu_custom_call.1} parent=1 // pred_check_branch
      %284 = sbr.rel (0) target = $region33
    $region32: #{tpu_custom_call.1} parent=1 // pred_region
      %s286 = ssub.s32 32, 32
      %287 = vsyncadd [#allocation3], %s286
      %s289 = sshll.u32 [#allocation2], 4
      %s290 = int_to_ptr.vmem [resolvable:$true] %s289
      %292 = dma.vmem_to_hbm [thread:$0]  %s290, 32, %s7, [#allocation3]
    $region33: #{tpu_custom_call.1} parent=1 // pred_fallthru
      _
    // Predicated region
    $region34: #{tpu_custom_call.1} parent=1 // pred_check
      _
    $region35: #{tpu_custom_call.1} parent=1 // pred_check_branch
      %294 = sbr.rel (0) target = $region37
    $region36: #{tpu_custom_call.1} parent=1 // pred_region
      %295 = dma.done [#allocation3], 32
    $region37: #{tpu_custom_call.1} parent=1 // pred_fallthru
      _
    %296 = vsyncpa [#allocation3], 1

</llo_original>
